<compile_context>
chip_gen: v5e
topology: v5e:2x2
jax: 0.10.0
libtpu: 0.0.40
codegen_flags: <defaults>
</compile_context>

<pallas_src>
import jax
import jax.numpy as jnp
from jax.experimental import pallas as pl
from jax.experimental.pallas import tpu as pltpu

_LANES = 128


def _hsigmoid_kernel(x_ref, o_ref):
    x = x_ref[...]
    three = jnp.asarray(3.0, x.dtype)
    zero = jnp.asarray(0.0, x.dtype)
    six = jnp.asarray(6.0, x.dtype)
    # relu6(x + 3) / 6 ; divide by 6 (not * (1/6)) so low-precision dtypes
    # (bf16/fp16) round the same way as torch's clamp(x+3, 0, 6) / 6.
    # (VPU/EUP work here is fully hidden under the HBM DMAs; do not "optimize".)
    o_ref[...] = jnp.clip(x + three, zero, six) / six


def _hsigmoid_jnp(x):
    three = jnp.asarray(3.0, x.dtype)
    zero = jnp.asarray(0.0, x.dtype)
    six = jnp.asarray(6.0, x.dtype)
    return jnp.clip(x + three, zero, six) / six


def _round_up(v: int, m: int) -> int:
    return ((v + m - 1) // m) * m


def _generation_params() -> tuple[int, int]:
    """Return (target_block_bytes, tensorcores_per_chip) for the local TPU."""
    kind = ""
    try:
        kind = jax.devices()[0].device_kind.lower()
    except Exception:
        pass
    if "7" in kind:
        # v7x: ~3.2 TB/s HBM, 2 TCs/chip, 64 MiB physical VMEM.
        # 4 MiB blocks halve the per-step overhead; 4 x 4 MiB buffers = 16 MiB.
        return 4 << 20, 2
    if "v4" in kind or "v5p" in kind:
        # Megacore chips: 2 TensorCores, plenty of VMEM; 2 MiB blocks suffice.
        return 2 << 20, 2
    # v6e / v5e / unknown: 1 TensorCore. 2 MiB blocks already reach ~85% of the
    # HBM roofline and 4 double-buffers (8 MiB) fit v5e's 16 MiB default scoped
    # VMEM, so stay conservative.
    return 2 << 20, 1


def _choose_tile_rows(rows: int, itemsize: int, target_bytes: int, n_tc: int) -> int:
    # Sublane multiple for this dtype (8 for f32, 16 for bf16/f16, 32 for int8/fp8).
    sub = 8 * max(1, 4 // itemsize)
    row_bytes = _LANES * itemsize
    target_rows = max(sub, _round_up(max(1, target_bytes // row_bytes), sub))
    # Never allocate a block (much) larger than the array itself.
    tile = min(target_rows, _round_up(rows, sub))
    if n_tc > 1:
        # Multi-TensorCore chips only: aim for an even grid of 2x (preferred)
        # or 1x the TC count so both cores get equal work, but never shrink
        # blocks below ~1 MiB (overhead-dominated at v7x's bandwidth).
        min_rows = max(sub, _round_up(max(1, (1 << 20) // row_bytes), sub))
        for steps in (2 * n_tc, n_tc):
            cand = _round_up(pl.cdiv(rows, steps), sub)
            if cand >= min_rows:
                tile = min(tile, cand)
                break
    return tile


def _hsigmoid_main(x2d: jax.Array, tile_rows: int, donate_input: bool) -> jax.Array:
    rows, lanes = x2d.shape
    itemsize = jnp.dtype(x2d.dtype).itemsize
    block_bytes = tile_rows * lanes * itemsize
    # Keep the compiler's scoped-VMEM budget in sync with the chosen block
    # size: 2 inputs + 2 outputs double-buffers plus headroom, clamped to a
    # range that is safe on every generation (v7x physical VMEM is 64 MiB).
    vmem_limit = min(48 << 20, max(16 << 20, 4 * block_bytes + (4 << 20)))

    kwargs = {}
    if donate_input:
        kwargs["input_output_aliases"] = {0: 0}

    n_main = rows * lanes
    return pl.pallas_call(
        _hsigmoid_kernel,
        out_shape=jax.ShapeDtypeStruct((rows, lanes), x2d.dtype),
        grid_spec=pltpu.PrefetchScalarGridSpec(
            num_scalar_prefetch=0,
            grid=(pl.cdiv(rows, tile_rows),),  # partial last block masked by Pallas
            in_specs=[pl.BlockSpec((tile_rows, lanes), lambda i: (i, 0))],
            out_specs=pl.BlockSpec((tile_rows, lanes), lambda i: (i, 0)),
        ),
        compiler_params=pltpu.CompilerParams(
            # "parallel" lets the single grid axis shard across both v7x
            # TensorCores; it is a no-op on 1-TC v5e/v6e.
            dimension_semantics=("parallel",),
            vmem_limit_bytes=int(vmem_limit),
        ),
        cost_estimate=pl.CostEstimate(
            flops=4 * n_main,
            transcendentals=0,
            bytes_accessed=2 * n_main * itemsize),
        **kwargs,
    )(x2d)


def hsigmoid(x: jax.Array, *, donate_input: bool = False) -> jax.Array:
    """Elementwise hard-sigmoid matching HSigmoid.forward: relu6(x + 3) / 6.

    `donate_input=True` aliases the kernel output onto the lane-aligned slab
    of the input (analogue of the module's `inplace=True`); only enable it
    when the caller no longer needs `x`.  Note: for integer inputs the alias
    applies to the float32 cast copy, not the caller's original buffer.
    """
    orig_shape = x.shape
    if not jnp.issubdtype(x.dtype, jnp.floating):
        # torch's `/ 6` promotes integral inputs to float; do the same.
        x = x.astype(jnp.float32)
    dtype = x.dtype
    itemsize = jnp.dtype(dtype).itemsize

    flat = x.reshape(-1)
    n = flat.shape[0]
    if n == 0:
        return flat.reshape(orig_shape)

    n_main = (n // _LANES) * _LANES
    tail_len = n - n_main

    pieces = []
    if n_main:
        rows = n_main // _LANES
        # No full-array pad: the aligned prefix is reshaped to a lane-dense
        # (rows, 128) slab (a cheap prefix view; free bitcast when tail_len==0).
        x2d = (flat if not tail_len else flat[:n_main]).reshape(rows, _LANES)
        target_bytes, n_tc = _generation_params()
        tile_rows = _choose_tile_rows(rows, itemsize, target_bytes, n_tc)
        main_out = _hsigmoid_main(x2d, tile_rows, donate_input)
        pieces.append(main_out.reshape(-1))
    if tail_len:
        # <=127 leftover elements: trivially cheap in plain jnp; not worth a
        # masked Pallas block or a full-array pad/copy.
        pieces.append(_hsigmoid_jnp(flat[n_main:]))

    out = pieces[0] if len(pieces) == 1 else jnp.concatenate(pieces)
    return out.reshape(orig_shape)


def hsigmoid_ref(x: jax.Array) -> jax.Array:
    return jnp.clip(x + 3.0, 0.0, 6.0) / 6.0


if __name__ == "__main__":
    key = jax.random.PRNGKey(0)
    # NCHW input like a PyTorch conv activation (lane-aligned element count).
    x = jax.random.normal(key, (2, 4, 16, 16), dtype=jnp.float32) * 4.0
    out = jax.block_until_ready(hsigmoid(x))
    ref = hsigmoid_ref(x)
    assert out.shape == x.shape and out.dtype == x.dtype
    assert jnp.allclose(out, ref, atol=1e-6, rtol=1e-6)

    # Odd-sized bf16 case: exercises the aligned-prefix + <=127-element jnp
    # tail path and the masked partial last Pallas block.
    x2 = jax.random.normal(jax.random.PRNGKey(1), (3, 5, 7, 11),
                           dtype=jnp.bfloat16) * 4.0
    out2 = jax.block_until_ready(hsigmoid(x2))
    ref2 = hsigmoid_ref(x2)
    assert out2.shape == x2.shape and out2.dtype == x2.dtype
    assert jnp.allclose(out2.astype(jnp.float32), ref2.astype(jnp.float32),
                        atol=2e-2, rtol=2e-2)

    # Tiny (< 128 elements) case: whole array handled by the jnp tail path.
    x3 = jax.random.normal(jax.random.PRNGKey(2), (5, 7), dtype=jnp.float32)
    out3 = jax.block_until_ready(hsigmoid(x3))
    assert jnp.allclose(out3, hsigmoid_ref(x3), atol=1e-6, rtol=1e-6)

    print("KERNEL_OK")
</pallas_src>

<mosaic_0001>
module attributes {stable_mosaic.version = 11 : i64} {
  func.func @_hsigmoid_kernel(%arg0: i32, %arg1: memref<16x128xf32, #tpu.memory_space<vmem>>, %arg2: memref<16x128xf32, #tpu.memory_space<vmem>>) attributes {dimension_semantics = [#tpu.dimension_semantics<parallel>], iteration_bounds = array<i64: 1>, scalar_prefetch = 0 : i64, scratch_operands = 0 : i64, tpu.core_type = #tpu.core_type<tc>, window_params = [{transform_indices = @transform_0, window_bounds = array<i64: 16, 128>}, {transform_indices = @transform_1, window_bounds = array<i64: 16, 128>}]} {
    %c0 = arith.constant 0 : index
    %c0_0 = arith.constant 0 : index
    %0 = vector.load %arg1[%c0, %c0_0] : memref<16x128xf32, #tpu.memory_space<vmem>>, vector<16x128xf32>
    %cst = arith.constant 3.000000e+00 : f32
    %1 = vector.broadcast %cst : f32 to vector<16x128xf32>
    %2 = arith.addf %0, %1 : vector<16x128xf32>
    %cst_1 = arith.constant 0.000000e+00 : f32
    %cst_2 = arith.constant 6.000000e+00 : f32
    %3 = vector.broadcast %cst_1 : f32 to vector<16x128xf32>
    %4 = arith.maximumf %3, %2 : vector<16x128xf32>
    %5 = vector.broadcast %cst_2 : f32 to vector<16x128xf32>
    %6 = arith.minimumf %5, %4 : vector<16x128xf32>
    %cst_3 = arith.constant 6.000000e+00 : f32
    %7 = vector.broadcast %cst_3 : f32 to vector<16x128xf32>
    %8 = arith.divf %6, %7 : vector<16x128xf32>
    %c0_4 = arith.constant 0 : index
    %c0_5 = arith.constant 0 : index
    %9 = vector.load %arg2[%c0_4, %c0_5] : memref<16x128xf32, #tpu.memory_space<vmem>>, vector<16x128xf32>
    tpu.vector_store %arg2[%c0_4, %c0_5], %8 {strides = array<i32>} : memref<16x128xf32, #tpu.memory_space<vmem>>, vector<16x128xf32>,
    return
  }
  func.func @transform_0(%arg0: i32) -> (i32, i32) {
    %c0_i32 = arith.constant 0 : i32
    %c0_i32_0 = arith.constant 0 : i32
    return %arg0, %c0_i32 : i32, i32
  }
  func.func @transform_1(%arg0: i32) -> (i32, i32) {
    %c0_i32 = arith.constant 0 : i32
    %c0_i32_0 = arith.constant 0 : i32
    return %arg0, %c0_i32 : i32, i32
  }
}

</mosaic_0001>

<llo_original>
// kernel: tpu_custom_call.1
$region0: #{tpu_custom_call.1}
  #allocation0 [shape = 'u32[]', space=smem, size = 0x4, offset = 0x4, fixed_abs, tag = 'smem constant byte address 0x4 - core index']
  #allocation1 [shape = 'u32[72,128]{1,0:T(1,128)}', space=vmem, size = 0x9000, scoped, tag = 'internal scratch']
  %s0 = inlined_call_operand.hbm [shape: f32[16,128], index: 0, kind: input, shape index: {}]
  %s1 = inlined_call_operand.hbm [shape: f32[16,128], index: 1, kind: output, shape index: {}]
  %s2 = sld [smem:[#allocation0]]
  $region18: #{tpu_custom_call.1} parent=0
    _
  %s4 = ssub.s32 1, %s2
  %s5 = scalar_select 0, %s4, %s2
  $region1: #{tpu_custom_call.1} parent=0
    #allocation2 [shape = 'u8[8192]{0}', space=vmem, size = 0x2000, scoped, tag = 'input window, operand 0, single buffered']
    #allocation3 [shape = 's32[1]{0}', space=sflag, size = 0x4, scoped, tag = 'scoped memory for tpu_custom_call.1']
    #allocation4 [shape = 's32[1]{0}', space=sflag, size = 0x4, scoped, tag = 'scoped memory for tpu_custom_call.1']
    #allocation5 [shape = 'u8[8192]{0}', space=vmem, size = 0x2000, scoped, tag = 'output window, operand 0, single buffered']
    %6 = vsyncpa [#allocation3], 0
    %7 = vsyncpa [#allocation4], 0
    // Predicated region
    $region2: #{tpu_custom_call.1} parent=1 // pred_check
      _
    $region3: #{tpu_custom_call.1} parent=1 // pred_check_branch
      %9 = sbr.rel (0) target = $region5
    $region4: #{tpu_custom_call.1} parent=1 // pred_region
      %11 = vsyncadd [#allocation3], 0
      %s12 = sshll.u32 %s0, 4
      %s13 = int_to_ptr.hbm [resolvable:$true] %s12
      %s14 = sshll.u32 [#allocation2], 4
      %s15 = int_to_ptr.vmem [resolvable:$true] %s14
      %20 = dma.hbm_to_vmem [thread:$0]  %s13, 256, %s15, [#allocation3], 128, 128, 8
    $region5: #{tpu_custom_call.1} parent=1 // pred_fallthru
      _
    // Predicated region
    $region6: #{tpu_custom_call.1} parent=1 // pred_check
      _
    $region7: #{tpu_custom_call.1} parent=1 // pred_check_branch
      %22 = sbr.rel (0) target = $region9
    $region8: #{tpu_custom_call.1} parent=1 // pred_region
      %24 = dma.done [#allocation3], 256
    $region9: #{tpu_custom_call.1} parent=1 // pred_fallthru
      _
    %v25 = vld [vmem:[#allocation2] sm:$0xff]
    %v26 = vld [vmem:[#allocation2 + $0x8] sm:$0xff]
    %v27 = vadd.f32 %v25, 3.0
    %v28 = vadd.f32 %v26, 3.0
    %v29 = vmax.f32 %v27, 0.0
    %v30 = vmax.f32 %v28, 0.0
    %v31 = vmin.f32 %v29, 6.0
    %v32 = vmin.f32 %v30, 6.0
    %v33 = vrcp.pop 6.0
    %v34 = vmul.f32 6.0, %v33
    %v35 = vsub.f32 1.0, %v34
    %v36 = vmul.f32 %v33, %v35
    %v37 = vadd.f32 %v33, %v36
    %vm38 = vweird.f32 %v33
    %v39 = vsel %vm38, %v33, %v37
    %v40 = vmul.f32 %v31, %v39
    %v41 = vmul.f32 %v32, %v39
    %42 = vst [vmem:[#allocation5] sm:$0xff] %v40
    %43 = vst [vmem:[#allocation5 + $0x8] sm:$0xff] %v41
    // Predicated region
    $region10: #{tpu_custom_call.1} parent=1 // pred_check
      _
    $region11: #{tpu_custom_call.1} parent=1 // pred_check_branch
      %45 = sbr.rel (0) target = $region13
    $region12: #{tpu_custom_call.1} parent=1 // pred_region
      %47 = vsyncadd [#allocation4], 0
      %s48 = sshll.u32 [#allocation5], 4
      %s49 = int_to_ptr.vmem [resolvable:$true] %s48
      %s50 = sshll.u32 %s1, 4
      %s51 = int_to_ptr.hbm [resolvable:$true] %s50
      %56 = dma.vmem_to_hbm [thread:$0]  %s49, 256, %s51, [#allocation4], 128, 128, 8
    $region13: #{tpu_custom_call.1} parent=1 // pred_fallthru
      _
    // Predicated region
    $region14: #{tpu_custom_call.1} parent=1 // pred_check
      _
    $region15: #{tpu_custom_call.1} parent=1 // pred_check_branch
      %58 = sbr.rel (0) target = $region17
    $region16: #{tpu_custom_call.1} parent=1 // pred_region
      %60 = dma.done [#allocation4], 256
    $region17: #{tpu_custom_call.1} parent=1 // pred_fallthru
      _
    %61 = vsyncpa [#allocation3], 1
    %62 = vsyncpa [#allocation4], 1

</llo_original>
